<compile_context>
chip_gen: v5e
topology: v5e:2x2
jax: 0.10.0
libtpu: 0.0.40
codegen_flags: <defaults>
</compile_context>

<pallas_src>
import jax
import jax.numpy as jnp
from jax import lax
from jax.experimental import pallas as pl
from jax.experimental.pallas import tpu as pltpu

D = 768                # embedding dim (6 * 128 lanes)
NUM_LABELS = 500       # label_embed rows
NUM_MODALITIES = 4     # modality_embed rows

# TODO(synk): real module loads label2index.json from disk; synthetic in-script dict here.
LABEL2INDEX = {f"label_{i}": i for i in range(NUM_LABELS)}


def _round_up(x, m):
    return (x + m - 1) // m * m


def _make_embed_add_kernel(tile_n):
    def kernel(label_idx_ref, mod_idx_ref, label_tbl_ref, mod_tbl_ref, out_ref):
        base = pl.program_id(0) * tile_n

        def body(r, carry):
            lab = label_idx_ref[base + r]                # SMEM scalar read
            mod = mod_idx_ref[base + r]                  # SMEM scalar read
            lrow = label_tbl_ref[pl.ds(lab, 1), :]       # (1, D) dynamic-row gather
            mrow = mod_tbl_ref[pl.ds(mod, 1), :]         # (1, D) dynamic-row gather
            out_ref[pl.ds(r, 1), :] = lrow + mrow        # lane-dense (1, D) store
            return carry

        # Unrolled so the LLO scheduler keeps the vld/vst slots full.
        lax.fori_loop(0, tile_n, body, 0, unroll=8)

    return kernel


def random_embed_forward(label_embed, modality_embed, label_code, modality_code,
                         tile_n=1024):
    """label_embed: (500, 768) f32, modality_embed: (4, 768) f32,
       label_code: (N,) int32, modality_code: (N,) int32  ->  (N, 768) f32."""
    n = int(label_code.shape[0])
    num_labels, d = label_embed.shape
    num_mods = modality_embed.shape[0]

    # Row tile: multiple of 8 sublanes, capped at tile_n (output tile <= 3 MiB VMEM).
    tile_n = min(tile_n, _round_up(n, 8))
    n_pad = _round_up(n, tile_n)

    # VMEM ref indexing has no runtime bounds check -> clamp; pad to full tiles.
    label_code = jnp.clip(label_code.astype(jnp.int32), 0, num_labels - 1)
    modality_code = jnp.clip(modality_code.astype(jnp.int32), 0, num_mods - 1)
    if n_pad != n:
        label_code = jnp.pad(label_code, (0, n_pad - n))
        modality_code = jnp.pad(modality_code, (0, n_pad - n))

    grid_spec = pltpu.PrefetchScalarGridSpec(
        num_scalar_prefetch=2,                    # label_code, modality_code -> SMEM
        grid=(n_pad // tile_n,),
        in_specs=[
            # Both tables fully VMEM-resident, constant index_maps (single DMA each).
            pl.BlockSpec((num_labels, d), lambda i, lab, mod: (0, 0)),
            pl.BlockSpec((num_mods, d), lambda i, lab, mod: (0, 0)),
        ],
        out_specs=pl.BlockSpec((tile_n, d), lambda i, lab, mod: (i, 0)),
    )

    out = pl.pallas_call(
        _make_embed_add_kernel(tile_n),
        grid_spec=grid_spec,
        out_shape=jax.ShapeDtypeStruct((n_pad, d), label_embed.dtype),
        compiler_params=pltpu.CompilerParams(
            dimension_semantics=("parallel",)),   # independent tiles; v7x 2-TC split
    )(label_code, modality_code, label_embed, modality_embed)

    return out[:n]


class RandomEmbedPallas:
    def __init__(self, key):
        k1, k2 = jax.random.split(key)
        # nn.Embedding default init ~ N(0, 1); deterministic synthetic weights.
        self.modality_embed = jax.random.normal(k1, (NUM_MODALITIES, D), jnp.float32)
        self.label_embed = jax.random.normal(k2, (NUM_LABELS, D), jnp.float32)
        self.label2index_mapping = LABEL2INDEX

    def __call__(self, input_text, modality_code):
        label_code = jnp.asarray(
            [self.label2index_mapping[t] for t in input_text], dtype=jnp.int32)
        modality_code = jnp.asarray(modality_code, dtype=jnp.int32)
        return random_embed_forward(
            self.label_embed, self.modality_embed, label_code, modality_code)


if __name__ == "__main__":
    key = jax.random.PRNGKey(0)
    model = RandomEmbedPallas(key)

    # Small example: 8 query texts, one modality code per query.
    input_text = [f"label_{i}" for i in [3, 17, 42, 7, 499, 0, 128, 255]]
    modality_code = jnp.array([0, 1, 2, 3, 0, 1, 2, 3], dtype=jnp.int32)

    out = model(input_text, modality_code)
    out = jax.block_until_ready(out)

    # Reference check in plain JAX.
    label_code = jnp.array([model.label2index_mapping[t] for t in input_text],
                           dtype=jnp.int32)
    ref = model.label_embed[label_code] + model.modality_embed[modality_code]
    assert out.shape == (len(input_text), D)
    assert jnp.allclose(out, ref, atol=1e-6), "mismatch vs reference"

    print("KERNEL_OK")
</pallas_src>

<mosaic_0001>
module attributes {stable_mosaic.version = 11 : i64} {
  func.func @kernel(%arg0: i32, %arg1: memref<8xi32, #tpu.memory_space<smem>>, %arg2: memref<8xi32, #tpu.memory_space<smem>>, %arg3: memref<500x768xf32, #tpu.memory_space<vmem>>, %arg4: memref<4x768xf32, #tpu.memory_space<vmem>>, %arg5: memref<8x768xf32, #tpu.memory_space<vmem>>) attributes {dimension_semantics = [#tpu.dimension_semantics<parallel>], iteration_bounds = array<i64: 1>, scalar_prefetch = 2 : i64, scratch_operands = 0 : i64, tpu.core_type = #tpu.core_type<tc>, window_params = [{pipeline_mode = #tpu.pipeline_mode<synchronous>, transform_indices = @transform_0, window_bounds = array<i64: 500, 768>}, {pipeline_mode = #tpu.pipeline_mode<synchronous>, transform_indices = @transform_1, window_bounds = array<i64: 4, 768>}, {transform_indices = @transform_2, window_bounds = array<i64: 8, 768>}]} {
    %c8_i32 = arith.constant 8 : i32
    %0 = arith.muli %arg0, %c8_i32 : i32
    %c0_i32 = arith.constant 0 : i32
    %1 = arith.addi %0, %c0_i32 : i32
    %2 = arith.index_cast %1 : i32 to index
    %3 = memref.load %arg1[%2] : memref<8xi32, #tpu.memory_space<smem>>
    %4 = arith.addi %0, %c0_i32 : i32
    %5 = arith.index_cast %4 : i32 to index
    %6 = memref.load %arg2[%5] : memref<8xi32, #tpu.memory_space<smem>>
    %7 = arith.index_cast %3 : i32 to index
    %c0 = arith.constant 0 : index
    %8 = vector.load %arg3[%7, %c0] : memref<500x768xf32, #tpu.memory_space<vmem>>, vector<1x768xf32>
    %9 = arith.index_cast %6 : i32 to index
    %c0_0 = arith.constant 0 : index
    %10 = vector.load %arg4[%9, %c0_0] : memref<4x768xf32, #tpu.memory_space<vmem>>, vector<1x768xf32>
    %11 = arith.addf %8, %10 : vector<1x768xf32>
    %12 = arith.index_cast %c0_i32 : i32 to index
    %c0_1 = arith.constant 0 : index
    %13 = vector.load %arg5[%12, %c0_1] : memref<8x768xf32, #tpu.memory_space<vmem>>, vector<1x768xf32>
    tpu.vector_store %arg5[%12, %c0_1], %11 {strides = array<i32>} : memref<8x768xf32, #tpu.memory_space<vmem>>, vector<1x768xf32>,
    %c1_i32 = arith.constant 1 : i32
    %14 = arith.addi %0, %c1_i32 : i32
    %15 = arith.index_cast %14 : i32 to index
    %16 = memref.load %arg1[%15] : memref<8xi32, #tpu.memory_space<smem>>
    %17 = arith.addi %0, %c1_i32 : i32
    %18 = arith.index_cast %17 : i32 to index
    %19 = memref.load %arg2[%18] : memref<8xi32, #tpu.memory_space<smem>>
    %20 = arith.index_cast %16 : i32 to index
    %c0_2 = arith.constant 0 : index
    %21 = vector.load %arg3[%20, %c0_2] : memref<500x768xf32, #tpu.memory_space<vmem>>, vector<1x768xf32>
    %22 = arith.index_cast %19 : i32 to index
    %c0_3 = arith.constant 0 : index
    %23 = vector.load %arg4[%22, %c0_3] : memref<4x768xf32, #tpu.memory_space<vmem>>, vector<1x768xf32>
    %24 = arith.addf %21, %23 : vector<1x768xf32>
    %25 = arith.index_cast %c1_i32 : i32 to index
    %c0_4 = arith.constant 0 : index
    %26 = vector.load %arg5[%25, %c0_4] : memref<8x768xf32, #tpu.memory_space<vmem>>, vector<1x768xf32>
    tpu.vector_store %arg5[%25, %c0_4], %24 {strides = array<i32>} : memref<8x768xf32, #tpu.memory_space<vmem>>, vector<1x768xf32>,
    %c2_i32 = arith.constant 2 : i32
    %27 = arith.addi %0, %c2_i32 : i32
    %28 = arith.index_cast %27 : i32 to index
    %29 = memref.load %arg1[%28] : memref<8xi32, #tpu.memory_space<smem>>
    %30 = arith.addi %0, %c2_i32 : i32
    %31 = arith.index_cast %30 : i32 to index
    %32 = memref.load %arg2[%31] : memref<8xi32, #tpu.memory_space<smem>>
    %33 = arith.index_cast %29 : i32 to index
    %c0_5 = arith.constant 0 : index
    %34 = vector.load %arg3[%33, %c0_5] : memref<500x768xf32, #tpu.memory_space<vmem>>, vector<1x768xf32>
    %35 = arith.index_cast %32 : i32 to index
    %c0_6 = arith.constant 0 : index
    %36 = vector.load %arg4[%35, %c0_6] : memref<4x768xf32, #tpu.memory_space<vmem>>, vector<1x768xf32>
    %37 = arith.addf %34, %36 : vector<1x768xf32>
    %38 = arith.index_cast %c2_i32 : i32 to index
    %c0_7 = arith.constant 0 : index
    %39 = vector.load %arg5[%38, %c0_7] : memref<8x768xf32, #tpu.memory_space<vmem>>, vector<1x768xf32>
    tpu.vector_store %arg5[%38, %c0_7], %37 {strides = array<i32>} : memref<8x768xf32, #tpu.memory_space<vmem>>, vector<1x768xf32>,
    %c3_i32 = arith.constant 3 : i32
    %40 = arith.addi %0, %c3_i32 : i32
    %41 = arith.index_cast %40 : i32 to index
    %42 = memref.load %arg1[%41] : memref<8xi32, #tpu.memory_space<smem>>
    %43 = arith.addi %0, %c3_i32 : i32
    %44 = arith.index_cast %43 : i32 to index
    %45 = memref.load %arg2[%44] : memref<8xi32, #tpu.memory_space<smem>>
    %46 = arith.index_cast %42 : i32 to index
    %c0_8 = arith.constant 0 : index
    %47 = vector.load %arg3[%46, %c0_8] : memref<500x768xf32, #tpu.memory_space<vmem>>, vector<1x768xf32>
    %48 = arith.index_cast %45 : i32 to index
    %c0_9 = arith.constant 0 : index
    %49 = vector.load %arg4[%48, %c0_9] : memref<4x768xf32, #tpu.memory_space<vmem>>, vector<1x768xf32>
    %50 = arith.addf %47, %49 : vector<1x768xf32>
    %51 = arith.index_cast %c3_i32 : i32 to index
    %c0_10 = arith.constant 0 : index
    %52 = vector.load %arg5[%51, %c0_10] : memref<8x768xf32, #tpu.memory_space<vmem>>, vector<1x768xf32>
    tpu.vector_store %arg5[%51, %c0_10], %50 {strides = array<i32>} : memref<8x768xf32, #tpu.memory_space<vmem>>, vector<1x768xf32>,
    %c4_i32 = arith.constant 4 : i32
    %53 = arith.addi %0, %c4_i32 : i32
    %54 = arith.index_cast %53 : i32 to index
    %55 = memref.load %arg1[%54] : memref<8xi32, #tpu.memory_space<smem>>
    %56 = arith.addi %0, %c4_i32 : i32
    %57 = arith.index_cast %56 : i32 to index
    %58 = memref.load %arg2[%57] : memref<8xi32, #tpu.memory_space<smem>>
    %59 = arith.index_cast %55 : i32 to index
    %c0_11 = arith.constant 0 : index
    %60 = vector.load %arg3[%59, %c0_11] : memref<500x768xf32, #tpu.memory_space<vmem>>, vector<1x768xf32>
    %61 = arith.index_cast %58 : i32 to index
    %c0_12 = arith.constant 0 : index
    %62 = vector.load %arg4[%61, %c0_12] : memref<4x768xf32, #tpu.memory_space<vmem>>, vector<1x768xf32>
    %63 = arith.addf %60, %62 : vector<1x768xf32>
    %64 = arith.index_cast %c4_i32 : i32 to index
    %c0_13 = arith.constant 0 : index
    %65 = vector.load %arg5[%64, %c0_13] : memref<8x768xf32, #tpu.memory_space<vmem>>, vector<1x768xf32>
    tpu.vector_store %arg5[%64, %c0_13], %63 {strides = array<i32>} : memref<8x768xf32, #tpu.memory_space<vmem>>, vector<1x768xf32>,
    %c5_i32 = arith.constant 5 : i32
    %66 = arith.addi %0, %c5_i32 : i32
    %67 = arith.index_cast %66 : i32 to index
    %68 = memref.load %arg1[%67] : memref<8xi32, #tpu.memory_space<smem>>
    %69 = arith.addi %0, %c5_i32 : i32
    %70 = arith.index_cast %69 : i32 to index
    %71 = memref.load %arg2[%70] : memref<8xi32, #tpu.memory_space<smem>>
    %72 = arith.index_cast %68 : i32 to index
    %c0_14 = arith.constant 0 : index
    %73 = vector.load %arg3[%72, %c0_14] : memref<500x768xf32, #tpu.memory_space<vmem>>, vector<1x768xf32>
    %74 = arith.index_cast %71 : i32 to index
    %c0_15 = arith.constant 0 : index
    %75 = vector.load %arg4[%74, %c0_15] : memref<4x768xf32, #tpu.memory_space<vmem>>, vector<1x768xf32>
    %76 = arith.addf %73, %75 : vector<1x768xf32>
    %77 = arith.index_cast %c5_i32 : i32 to index
    %c0_16 = arith.constant 0 : index
    %78 = vector.load %arg5[%77, %c0_16] : memref<8x768xf32, #tpu.memory_space<vmem>>, vector<1x768xf32>
    tpu.vector_store %arg5[%77, %c0_16], %76 {strides = array<i32>} : memref<8x768xf32, #tpu.memory_space<vmem>>, vector<1x768xf32>,
    %c6_i32 = arith.constant 6 : i32
    %79 = arith.addi %0, %c6_i32 : i32
    %80 = arith.index_cast %79 : i32 to index
    %81 = memref.load %arg1[%80] : memref<8xi32, #tpu.memory_space<smem>>
    %82 = arith.addi %0, %c6_i32 : i32
    %83 = arith.index_cast %82 : i32 to index
    %84 = memref.load %arg2[%83] : memref<8xi32, #tpu.memory_space<smem>>
    %85 = arith.index_cast %81 : i32 to index
    %c0_17 = arith.constant 0 : index
    %86 = vector.load %arg3[%85, %c0_17] : memref<500x768xf32, #tpu.memory_space<vmem>>, vector<1x768xf32>
    %87 = arith.index_cast %84 : i32 to index
    %c0_18 = arith.constant 0 : index
    %88 = vector.load %arg4[%87, %c0_18] : memref<4x768xf32, #tpu.memory_space<vmem>>, vector<1x768xf32>
    %89 = arith.addf %86, %88 : vector<1x768xf32>
    %90 = arith.index_cast %c6_i32 : i32 to index
    %c0_19 = arith.constant 0 : index
    %91 = vector.load %arg5[%90, %c0_19] : memref<8x768xf32, #tpu.memory_space<vmem>>, vector<1x768xf32>
    tpu.vector_store %arg5[%90, %c0_19], %89 {strides = array<i32>} : memref<8x768xf32, #tpu.memory_space<vmem>>, vector<1x768xf32>,
    %c7_i32 = arith.constant 7 : i32
    %92 = arith.addi %0, %c7_i32 : i32
    %93 = arith.index_cast %92 : i32 to index
    %94 = memref.load %arg1[%93] : memref<8xi32, #tpu.memory_space<smem>>
    %95 = arith.addi %0, %c7_i32 : i32
    %96 = arith.index_cast %95 : i32 to index
    %97 = memref.load %arg2[%96] : memref<8xi32, #tpu.memory_space<smem>>
    %98 = arith.index_cast %94 : i32 to index
    %c0_20 = arith.constant 0 : index
    %99 = vector.load %arg3[%98, %c0_20] : memref<500x768xf32, #tpu.memory_space<vmem>>, vector<1x768xf32>
    %100 = arith.index_cast %97 : i32 to index
    %c0_21 = arith.constant 0 : index
    %101 = vector.load %arg4[%100, %c0_21] : memref<4x768xf32, #tpu.memory_space<vmem>>, vector<1x768xf32>
    %102 = arith.addf %99, %101 : vector<1x768xf32>
    %103 = arith.index_cast %c7_i32 : i32 to index
    %c0_22 = arith.constant 0 : index
    %104 = vector.load %arg5[%103, %c0_22] : memref<8x768xf32, #tpu.memory_space<vmem>>, vector<1x768xf32>
    tpu.vector_store %arg5[%103, %c0_22], %102 {strides = array<i32>} : memref<8x768xf32, #tpu.memory_space<vmem>>, vector<1x768xf32>,
    %c8_i32_23 = arith.constant 8 : i32
    return
  }
  func.func @transform_0(%arg0: i32, %arg1: memref<8xi32, #tpu.memory_space<smem>>, %arg2: memref<8xi32, #tpu.memory_space<smem>>) -> (i32, i32) {
    %c0_i32 = arith.constant 0 : i32
    %c0_i32_0 = arith.constant 0 : i32
    %c0_i32_1 = arith.constant 0 : i32
    return %c0_i32, %c0_i32_0 : i32, i32
  }
  func.func @transform_1(%arg0: i32, %arg1: memref<8xi32, #tpu.memory_space<smem>>, %arg2: memref<8xi32, #tpu.memory_space<smem>>) -> (i32, i32) {
    %c0_i32 = arith.constant 0 : i32
    %c0_i32_0 = arith.constant 0 : i32
    %c0_i32_1 = arith.constant 0 : i32
    return %c0_i32, %c0_i32_0 : i32, i32
  }
  func.func @transform_2(%arg0: i32, %arg1: memref<8xi32, #tpu.memory_space<smem>>, %arg2: memref<8xi32, #tpu.memory_space<smem>>) -> (i32, i32) {
    %c0_i32 = arith.constant 0 : i32
    %c0_i32_0 = arith.constant 0 : i32
    return %arg0, %c0_i32 : i32, i32
  }
}

</mosaic_0001>

<llo_original>
// kernel: tpu_custom_call.1
$region0: #{tpu_custom_call.1}
  #allocation0 [shape = 'u32[]', space=smem, size = 0x4, offset = 0x4, fixed_abs, tag = 'smem constant byte address 0x4 - core index']
  #allocation1 [shape = 'u32[72,128]{1,0:T(1,128)}', space=vmem, size = 0x9000, scoped, tag = 'internal scratch']
  #allocation2 [shape = 's32[1]{0}', space=sflag, size = 0x4, scoped, tag = 'scoped memory for tpu_custom_call.1']
  #allocation3 [shape = 'u8[512]{0}', space=smem, size = 0x200, scoped, tag = 'prefetched SMEM operand 0']
  #allocation4 [shape = 'u8[512]{0}', space=smem, size = 0x200, scoped, tag = 'prefetched SMEM operand 1']
  %s0 = inlined_call_operand.hbm [shape: s32[8], index: 0, kind: input, shape index: {}]
  %s1 = inlined_call_operand.hbm [shape: s32[8], index: 1, kind: input, shape index: {}]
  %s2 = inlined_call_operand.hbm [shape: f32[500,768], index: 2, kind: input, shape index: {}]
  %s3 = inlined_call_operand.hbm [shape: f32[4,768], index: 3, kind: input, shape index: {}]
  %s4 = inlined_call_operand.hbm [shape: f32[8,768], index: 4, kind: output, shape index: {}]
  %s5 = sld [smem:[#allocation0]]
  $region26: #{tpu_custom_call.1} parent=0
    _
  %s7 = ssub.s32 1, %s5
  %s8 = scalar_select 0, %s7, %s5
  %s10 = sshll.u32 %s0, 4
  %s11 = int_to_ptr.hbm [resolvable:$true] %s10
  %13 = dma.hbm_to_smem %s11, 16, [#allocation3], [#allocation2]
  %s15 = sshll.u32 %s1, 4
  %s16 = int_to_ptr.hbm [resolvable:$true] %s15
  %18 = dma.hbm_to_smem %s16, 16, [#allocation4], [#allocation2]
  %20 = dma.done [#allocation2], 32
  %21 = sfence
  $region1: #{tpu_custom_call.1} parent=0
    #allocation5 [shape = 'u8[1548288]{0}', space=vmem, size = 0x17a000, scoped, tag = 'input window, operand 2, single buffered']
    #allocation6 [shape = 's32[1]{0}', space=sflag, size = 0x4, scoped, tag = 'scoped memory for tpu_custom_call.1']
    #allocation7 [shape = 's32[1]{0}', space=sflag, size = 0x4, scoped, tag = 'scoped memory for tpu_custom_call.1']
    #allocation8 [shape = 'u8[12288]{0}', space=vmem, size = 0x3000, scoped, tag = 'input window, operand 3, single buffered']
    #allocation9 [shape = 's32[1]{0}', space=sflag, size = 0x4, scoped, tag = 'scoped memory for tpu_custom_call.1']
    #allocation10 [shape = 'u8[24576]{0}', space=vmem, size = 0x6000, scoped, tag = 'output window, operand 0, single buffered']
    %22 = vsyncpa [#allocation6], 0
    %23 = vsyncpa [#allocation9], 0
    %24 = vsyncpa [#allocation7], 0
    // Predicated region
    $region2: #{tpu_custom_call.1} parent=1 // pred_check
      _
    $region3: #{tpu_custom_call.1} parent=1 // pred_check_branch
      %26 = sbr.rel (0) target = $region5
    $region4: #{tpu_custom_call.1} parent=1 // pred_region
      %28 = vsyncadd [#allocation6], 0
      %s29 = sshll.u32 %s2, 4
      %s30 = int_to_ptr.hbm [resolvable:$true] %s29
      %s31 = sshll.u32 [#allocation5], 4
      %s32 = int_to_ptr.vmem [resolvable:$true] %s31
      %37 = dma.hbm_to_vmem [thread:$0]  %s30, 48384, %s32, [#allocation6], 768, 768, 48
    $region5: #{tpu_custom_call.1} parent=1 // pred_fallthru
      _
    // Predicated region
    $region6: #{tpu_custom_call.1} parent=1 // pred_check
      _
    $region7: #{tpu_custom_call.1} parent=1 // pred_check_branch
      %39 = sbr.rel (0) target = $region9
    $region8: #{tpu_custom_call.1} parent=1 // pred_region
      %41 = vsyncadd [#allocation9], 0
      %s43 = sshll.u32 %s3, 4
      %s44 = int_to_ptr.hbm [resolvable:$true] %s43
      %s45 = sshll.u32 [#allocation8], 4
      %s46 = int_to_ptr.vmem [resolvable:$true] %s45
      %48 = dma.hbm_to_vmem [thread:$0]  %s44, 384, %s46, [#allocation9]
    $region9: #{tpu_custom_call.1} parent=1 // pred_fallthru
      _
    // Predicated region
    $region10: #{tpu_custom_call.1} parent=1 // pred_check
      _
    $region11: #{tpu_custom_call.1} parent=1 // pred_check_branch
      %50 = sbr.rel (0) target = $region13
    $region12: #{tpu_custom_call.1} parent=1 // pred_region
      %52 = dma.done [#allocation6], 48384
    $region13: #{tpu_custom_call.1} parent=1 // pred_fallthru
      _
    // Predicated region
    $region14: #{tpu_custom_call.1} parent=1 // pred_check
      _
    $region15: #{tpu_custom_call.1} parent=1 // pred_check_branch
      %54 = sbr.rel (0) target = $region17
    $region16: #{tpu_custom_call.1} parent=1 // pred_region
      %56 = dma.done [#allocation9], 384
    $region17: #{tpu_custom_call.1} parent=1 // pred_fallthru
      _
    %s57 = smul.u32 0, 8
    %s58 = sld [smem:[#allocation3 + %s57]]
    %s59 = sld [smem:[#allocation4 + %s57]]
    %s60 = sshra.s32 %s58, 3
    %s61 = sand.u32 %s58, 7
    %s62 = sshra.s32 %s58, 3
    %s63 = sand.u32 %s58, 7
    %s64 = smul.u32 %s60, 6
    %s65 = smul.u32 %s64, 8
    %s66 = sadd.s32 %s65, %s63
    %s67 = scalar_lea.vmem [#allocation5], %s66
    %v68 = vld [vmem:[%s67] ss:$8 sm:$0xf]
    %v69 = vld [vmem:[%s67] ss:$8 sm:$0x30]
    %v70 = vor.u32 %v68, %v69
    %s71 = sshra.s32 %s59, 2
    %s72 = sand.u32 %s59, 3
    %s73 = sshra.s32 %s59, 2
    %s74 = sand.u32 %s59, 3
    %s75 = smul.u32 %s71, 6
    %s76 = smul.u32 %s75, 4
    %s77 = sadd.s32 %s76, %s74
    %s78 = scalar_lea.vmem [#allocation8], %s77
    %v79 = vld [vmem:[%s78] ss:$4 sm:$0x3f]
    %v80 = vadd.f32 %v70, %v79
    %v81 = vlaneseq
    %vm82 = vcmp.ge.s32.totalorder %v81, 0
    %vm83 = vcmp.lt.s32.totalorder %v81, 768
    %vm84 = vmand %vm82, %vm83
    %85 = vst.msk [vmem:[#allocation10] ss:$8 sm:$0xf] %vm84, %v80
    %86 = vst.msk [vmem:[#allocation10] ss:$8 sm:$0x30] %vm84, %v80
    %s87 = sadd.s32 %s57, 1
    %s88 = sld [smem:[#allocation3 + %s87]]
    %s89 = sld [smem:[#allocation4 + %s87]]
    %s90 = sshra.s32 %s88, 3
    %s91 = sand.u32 %s88, 7
    %s92 = sshra.s32 %s88, 3
    %s93 = sand.u32 %s88, 7
    %s94 = smul.u32 %s90, 6
    %s95 = smul.u32 %s94, 8
    %s96 = sadd.s32 %s95, %s93
    %s97 = scalar_lea.vmem [#allocation5], %s96
    %v98 = vld [vmem:[%s97] ss:$8 sm:$0xf]
    %v99 = vld [vmem:[%s97] ss:$8 sm:$0x30]
    %v100 = vor.u32 %v98, %v99
    %s101 = sshra.s32 %s89, 2
    %s102 = sand.u32 %s89, 3
    %s103 = sshra.s32 %s89, 2
    %s104 = sand.u32 %s89, 3
    %s105 = smul.u32 %s101, 6
    %s106 = smul.u32 %s105, 4
    %s107 = sadd.s32 %s106, %s104
    %s108 = scalar_lea.vmem [#allocation8], %s107
    %v109 = vld [vmem:[%s108] ss:$4 sm:$0x3f]
    %v110 = vadd.f32 %v100, %v109
    %s111 = scalar_lea.vmem [#allocation10], 1
    %112 = vst.msk [vmem:[%s111] ss:$8 sm:$0xf] %vm84, %v110
    %113 = vst.msk [vmem:[%s111] ss:$8 sm:$0x30] %vm84, %v110
    %s114 = sadd.s32 %s57, 2
    %s115 = sld [smem:[#allocation3 + %s114]]
    %s116 = sld [smem:[#allocation4 + %s114]]
    %s117 = sshra.s32 %s115, 3
    %s118 = sand.u32 %s115, 7
    %s119 = sshra.s32 %s115, 3
    %s120 = sand.u32 %s115, 7
    %s121 = smul.u32 %s117, 6
    %s122 = smul.u32 %s121, 8
    %s123 = sadd.s32 %s122, %s120
    %s124 = scalar_lea.vmem [#allocation5], %s123
    %v125 = vld [vmem:[%s124] ss:$8 sm:$0xf]
    %v126 = vld [vmem:[%s124] ss:$8 sm:$0x30]
    %v127 = vor.u32 %v125, %v126
    %s128 = sshra.s32 %s116, 2
    %s129 = sand.u32 %s116, 3
    %s130 = sshra.s32 %s116, 2
    %s131 = sand.u32 %s116, 3
    %s132 = smul.u32 %s128, 6
    %s133 = smul.u32 %s132, 4
    %s134 = sadd.s32 %s133, %s131
    %s135 = scalar_lea.vmem [#allocation8], %s134
    %v136 = vld [vmem:[%s135] ss:$4 sm:$0x3f]
    %v137 = vadd.f32 %v127, %v136
    %s138 = scalar_lea.vmem [#allocation10], 2
    %139 = vst.msk [vmem:[%s138] ss:$8 sm:$0xf] %vm84, %v137
    %140 = vst.msk [vmem:[%s138] ss:$8 sm:$0x30] %vm84, %v137
    %s141 = sadd.s32 %s57, 3
    %s142 = sld [smem:[#allocation3 + %s141]]
    %s143 = sld [smem:[#allocation4 + %s141]]
    %s144 = sshra.s32 %s142, 3
    %s145 = sand.u32 %s142, 7
    %s146 = sshra.s32 %s142, 3
    %s147 = sand.u32 %s142, 7
    %s148 = smul.u32 %s144, 6
    %s149 = smul.u32 %s148, 8
    %s150 = sadd.s32 %s149, %s147
    %s151 = scalar_lea.vmem [#allocation5], %s150
    %v152 = vld [vmem:[%s151] ss:$8 sm:$0xf]
    %v153 = vld [vmem:[%s151] ss:$8 sm:$0x30]
    %v154 = vor.u32 %v152, %v153
    %s155 = sshra.s32 %s143, 2
    %s156 = sand.u32 %s143, 3
    %s157 = sshra.s32 %s143, 2
    %s158 = sand.u32 %s143, 3
    %s159 = smul.u32 %s155, 6
    %s160 = smul.u32 %s159, 4
    %s161 = sadd.s32 %s160, %s158
    %s162 = scalar_lea.vmem [#allocation8], %s161
    %v163 = vld [vmem:[%s162] ss:$4 sm:$0x3f]
    %v164 = vadd.f32 %v154, %v163
    %s165 = scalar_lea.vmem [#allocation10], 3
    %166 = vst.msk [vmem:[%s165] ss:$8 sm:$0xf] %vm84, %v164
    %167 = vst.msk [vmem:[%s165] ss:$8 sm:$0x30] %vm84, %v164
    %s168 = sadd.s32 %s57, 4
    %s169 = sld [smem:[#allocation3 + %s168]]
    %s170 = sld [smem:[#allocation4 + %s168]]
    %s171 = sshra.s32 %s169, 3
    %s172 = sand.u32 %s169, 7
    %s173 = sshra.s32 %s169, 3
    %s174 = sand.u32 %s169, 7
    %s175 = smul.u32 %s171, 6
    %s176 = smul.u32 %s175, 8
    %s177 = sadd.s32 %s176, %s174
    %s178 = scalar_lea.vmem [#allocation5], %s177
    %v179 = vld [vmem:[%s178] ss:$8 sm:$0xf]
    %v180 = vld [vmem:[%s178] ss:$8 sm:$0x30]
    %v181 = vor.u32 %v179, %v180
    %s182 = sshra.s32 %s170, 2
    %s183 = sand.u32 %s170, 3
    %s184 = sshra.s32 %s170, 2
    %s185 = sand.u32 %s170, 3
    %s186 = smul.u32 %s182, 6
    %s187 = smul.u32 %s186, 4
    %s188 = sadd.s32 %s187, %s185
    %s189 = scalar_lea.vmem [#allocation8], %s188
    %v190 = vld [vmem:[%s189] ss:$4 sm:$0x3f]
    %v191 = vadd.f32 %v181, %v190
    %s192 = scalar_lea.vmem [#allocation10], 4
    %193 = vst.msk [vmem:[%s192] ss:$8 sm:$0xf] %vm84, %v191
    %194 = vst.msk [vmem:[%s192] ss:$8 sm:$0x30] %vm84, %v191
    %s195 = sadd.s32 %s57, 5
    %s196 = sld [smem:[#allocation3 + %s195]]
    %s197 = sld [smem:[#allocation4 + %s195]]
    %s198 = sshra.s32 %s196, 3
    %s199 = sand.u32 %s196, 7
    %s200 = sshra.s32 %s196, 3
    %s201 = sand.u32 %s196, 7
    %s202 = smul.u32 %s198, 6
    %s203 = smul.u32 %s202, 8
    %s204 = sadd.s32 %s203, %s201
    %s205 = scalar_lea.vmem [#allocation5], %s204
    %v206 = vld [vmem:[%s205] ss:$8 sm:$0xf]
    %v207 = vld [vmem:[%s205] ss:$8 sm:$0x30]
    %v208 = vor.u32 %v206, %v207
    %s209 = sshra.s32 %s197, 2
    %s210 = sand.u32 %s197, 3
    %s211 = sshra.s32 %s197, 2
    %s212 = sand.u32 %s197, 3
    %s213 = smul.u32 %s209, 6
    %s214 = smul.u32 %s213, 4
    %s215 = sadd.s32 %s214, %s212
    %s216 = scalar_lea.vmem [#allocation8], %s215
    %v217 = vld [vmem:[%s216] ss:$4 sm:$0x3f]
    %v218 = vadd.f32 %v208, %v217
    %s219 = scalar_lea.vmem [#allocation10], 5
    %220 = vst.msk [vmem:[%s219] ss:$8 sm:$0xf] %vm84, %v218
    %221 = vst.msk [vmem:[%s219] ss:$8 sm:$0x30] %vm84, %v218
    %s222 = sadd.s32 %s57, 6
    %s223 = sld [smem:[#allocation3 + %s222]]
    %s224 = sld [smem:[#allocation4 + %s222]]
    %s225 = sshra.s32 %s223, 3
    %s226 = sand.u32 %s223, 7
    %s227 = sshra.s32 %s223, 3
    %s228 = sand.u32 %s223, 7
    %s229 = smul.u32 %s225, 6
    %s230 = smul.u32 %s229, 8
    %s231 = sadd.s32 %s230, %s228
    %s232 = scalar_lea.vmem [#allocation5], %s231
    %v233 = vld [vmem:[%s232] ss:$8 sm:$0xf]
    %v234 = vld [vmem:[%s232] ss:$8 sm:$0x30]
    %v235 = vor.u32 %v233, %v234
    %s236 = sshra.s32 %s224, 2
    %s237 = sand.u32 %s224, 3
    %s238 = sshra.s32 %s224, 2
    %s239 = sand.u32 %s224, 3
    %s240 = smul.u32 %s236, 6
    %s241 = smul.u32 %s240, 4
    %s242 = sadd.s32 %s241, %s239
    %s243 = scalar_lea.vmem [#allocation8], %s242
    %v244 = vld [vmem:[%s243] ss:$4 sm:$0x3f]
    %v245 = vadd.f32 %v235, %v244
    %s246 = scalar_lea.vmem [#allocation10], 6
    %247 = vst.msk [vmem:[%s246] ss:$8 sm:$0xf] %vm84, %v245
    %248 = vst.msk [vmem:[%s246] ss:$8 sm:$0x30] %vm84, %v245
    %s249 = sadd.s32 %s57, 7
    %s250 = sld [smem:[#allocation3 + %s249]]
    %s251 = sld [smem:[#allocation4 + %s249]]
    %s252 = sshra.s32 %s250, 3
    %s253 = sand.u32 %s250, 7
    %s254 = sshra.s32 %s250, 3
    %s255 = sand.u32 %s250, 7
    %s256 = smul.u32 %s252, 6
    %s257 = smul.u32 %s256, 8
    %s258 = sadd.s32 %s257, %s255
    %s259 = scalar_lea.vmem [#allocation5], %s258
    %v260 = vld [vmem:[%s259] ss:$8 sm:$0xf]
    %v261 = vld [vmem:[%s259] ss:$8 sm:$0x30]
    %v262 = vor.u32 %v260, %v261
    %s263 = sshra.s32 %s251, 2
    %s264 = sand.u32 %s251, 3
    %s265 = sshra.s32 %s251, 2
    %s266 = sand.u32 %s251, 3
    %s267 = smul.u32 %s263, 6
    %s268 = smul.u32 %s267, 4
    %s269 = sadd.s32 %s268, %s266
    %s270 = scalar_lea.vmem [#allocation8], %s269
    %v271 = vld [vmem:[%s270] ss:$4 sm:$0x3f]
    %v272 = vadd.f32 %v262, %v271
    %s273 = scalar_lea.vmem [#allocation10], 7
    %274 = vst.msk [vmem:[%s273] ss:$8 sm:$0xf] %vm84, %v272
    %275 = vst.msk [vmem:[%s273] ss:$8 sm:$0x30] %vm84, %v272
    // Predicated region
    $region18: #{tpu_custom_call.1} parent=1 // pred_check
      _
    $region19: #{tpu_custom_call.1} parent=1 // pred_check_branch
      %277 = sbr.rel (0) target = $region21
    $region20: #{tpu_custom_call.1} parent=1 // pred_region
      %279 = vsyncadd [#allocation7], 0
      %s281 = sshll.u32 [#allocation10], 4
      %s282 = int_to_ptr.vmem [resolvable:$true] %s281
      %s283 = sshll.u32 %s4, 4
      %s284 = int_to_ptr.hbm [resolvable:$true] %s283
      %286 = dma.vmem_to_hbm [thread:$0]  %s282, 768, %s284, [#allocation7]
    $region21: #{tpu_custom_call.1} parent=1 // pred_fallthru
      _
    // Predicated region
    $region22: #{tpu_custom_call.1} parent=1 // pred_check
      _
    $region23: #{tpu_custom_call.1} parent=1 // pred_check_branch
      %288 = sbr.rel (0) target = $region25
    $region24: #{tpu_custom_call.1} parent=1 // pred_region
      %290 = dma.done [#allocation7], 768
    $region25: #{tpu_custom_call.1} parent=1 // pred_fallthru
      _
    %291 = vsyncpa [#allocation6], 1
    %292 = vsyncpa [#allocation9], 1
    %293 = vsyncpa [#allocation7], 1

</llo_original>
